<compile_context>
chip_gen: v7x
topology: tpu7x:2x2x1
jax: 0.10.0
libtpu: 0.0.40
codegen_flags: <defaults>
</compile_context>

<pallas_src>
import jax
import jax.numpy as jnp
from jax.experimental import pallas as pl
from jax.experimental.pallas import tpu as pltpu


# --------------------------------------------------------------------------- #
# Kernel
# --------------------------------------------------------------------------- #
def _din_pool_kernel(kl_ref,                     # (BB, 1)  int32   VMEM
                     q_ref,                      # (BB, E)  f32     VMEM
                     k_ref,                      # (BB, T, E) f32   VMEM
                     w1k_ref,                    # (E, H1p)  W1_k - W1_diff
                     w1p_ref,                    # (E, H1p)  W1_prod
                     w1q_ref,                    # (E, H1p)  W1_q + W1_diff
                     b1_ref,                     # (1, H1p)  f32
                     w2_ref,                     # (H1p, H2p)
                     b2_ref,                     # (1, H2p)  f32
                     w3_ref,                     # (H2p, 1)
                     b3_ref,                     # (1,)      f32   SMEM
                     o_ref):                     # (BB, E)   f32
    BB, T, E = k_ref.shape
    H1p = w1k_ref.shape[1]
    mm_dtype = w1k_ref.dtype                     # bf16 on v6e/v7x, f32 on v5e

    keys = k_ref[...]                            # (BB, T, E) f32
    q = q_ref[...]                               # (BB, E)    f32

    k_flat = keys.reshape(BB * T, E)
    qk_flat = (q[:, None, :] * keys).reshape(BB * T, E)   # q*k, f32

    # -------- layer 1: split-W1 matmuls (q term hoisted out of T) ----------
    h1_flat = (jnp.dot(k_flat.astype(mm_dtype), w1k_ref[...],
                       preferred_element_type=jnp.float32)
               + jnp.dot(qk_flat.astype(mm_dtype), w1p_ref[...],
                         preferred_element_type=jnp.float32))          # (BB*T, H1p)
    q_term = jnp.dot(q.astype(mm_dtype), w1q_ref[...],
                     preferred_element_type=jnp.float32)               # (BB, H1p)
    h1 = h1_flat.reshape(BB, T, H1p) + q_term[:, None, :] + b1_ref[...]
    h1 = jax.nn.sigmoid(h1)                                            # f32
    h1_flat = h1.reshape(BB * T, H1p)

    # -------- layer 2 ------------------------------------------------------
    h2 = jnp.dot(h1_flat.astype(mm_dtype), w2_ref[...],
                 preferred_element_type=jnp.float32)
    h2 = jax.nn.sigmoid(h2 + b2_ref[...])                              # (BB*T, H2p)

    # -------- final dense (40 -> 1) ----------------------------------------
    score = jnp.dot(h2.astype(mm_dtype), w3_ref[...],
                    preferred_element_type=jnp.float32)                # (BB*T, 1)
    score = score.reshape(BB, T, 1) + b3_ref[0]

    # -------- vectorized length mask (padding weight = 0, no softmax) ------
    pos = jax.lax.broadcasted_iota(jnp.int32, (BB, T, 1), 1)
    seq_len = kl_ref[...].reshape(BB, 1, 1)
    score = jnp.where(pos < seq_len, score, 0.0)

    # -------- weighted sum over T (VPU mul + XLU sublane reduce, f32) ------
    pooled = jnp.sum(score * keys, axis=1)                             # (BB, E)
    o_ref[...] = pooled.astype(o_ref.dtype)


# --------------------------------------------------------------------------- #
# Wrapper
# --------------------------------------------------------------------------- #
def _round_up(x, m):
    return ((x + m - 1) // m) * m


def _pad2(x, rows, cols):
    r, c = x.shape
    return jnp.pad(x, ((0, rows - r), (0, cols - c)))


def _matmul_dtype():
    """bf16 matmul operands on v6e / v7x, f32 otherwise (v5e has no bf16 VPU/EUP)."""
    try:
        kind = jax.devices()[0].device_kind.lower()
    except Exception:
        return jnp.float32
    if ("v6" in kind) or ("v7" in kind) or ("tpu7" in kind):
        return jnp.bfloat16
    return jnp.float32


def hist_attention_seq_pooling(query, keys, keys_length, params, *, block_b=None):
    """query (B,1,E) f32, keys (B,T,E) f32, keys_length (B,) int -> (B,1,E) f32."""
    w1, b1, w2, b2, w3, b3 = params
    B, T, E = keys.shape
    E4, H1 = w1.shape
    H2 = w2.shape[1]
    assert E4 == 4 * E

    mm_dtype = _matmul_dtype()

    # ---- pad hidden dims to full 128-lane multiples (zero pad) -------------
    H1p = _round_up(H1, 128)
    H2p = _round_up(H2, 128)

    # W1 rows follow the concat order [q, k, q-k, q*k].
    w1_q = w1[0 * E:1 * E]
    w1_k = w1[1 * E:2 * E]
    w1_d = w1[2 * E:3 * E]
    w1_p = w1[3 * E:4 * E]
    w1k = _pad2(w1_k - w1_d, E, H1p).astype(mm_dtype)
    w1p = _pad2(w1_p, E, H1p).astype(mm_dtype)
    w1q = _pad2(w1_q + w1_d, E, H1p).astype(mm_dtype)
    b1p = _pad2(b1.reshape(1, H1), 1, H1p).astype(jnp.float32)
    w2p = _pad2(w2, H1p, H2p).astype(mm_dtype)          # zero rows kill sigmoid(0)=0.5 of pad cols
    b2p = _pad2(b2.reshape(1, H2), 1, H2p).astype(jnp.float32)
    w3p = _pad2(w3, H2p, 1).astype(mm_dtype)
    b3s = jnp.reshape(b3, (1,)).astype(jnp.float32)

    # ---- choose batch block, pad batch --------------------------------------
    if block_b is None:
        # Small B: one block (block must equal full dim or be a multiple of 8).
        # Large B: 128 batches/step -> >=2 grid steps, shardable across v7x TCs.
        block_b = B if B <= 128 else 128
    BB = block_b
    B_pad = _round_up(B, BB)

    q2 = query.reshape(B, E).astype(jnp.float32)
    k2 = keys.astype(jnp.float32)
    kl2 = keys_length.astype(jnp.int32)
    if B_pad != B:
        pad = B_pad - B
        q2 = jnp.concatenate([q2, jnp.zeros((pad, E), jnp.float32)], axis=0)
        k2 = jnp.concatenate([k2, jnp.zeros((pad, T, E), jnp.float32)], axis=0)
        kl2 = jnp.concatenate([kl2, jnp.zeros((pad,), jnp.int32)], axis=0)
    kl2 = kl2.reshape(B_pad, 1)

    out = pl.pallas_call(
        _din_pool_kernel,
        out_shape=jax.ShapeDtypeStruct((B_pad, E), jnp.float32),
        grid=(B_pad // BB,),
        in_specs=[
            pl.BlockSpec((BB, 1), lambda i: (i, 0)),          # keys_length
            pl.BlockSpec((BB, E), lambda i: (i, 0)),          # query (B, E)
            pl.BlockSpec((BB, T, E), lambda i: (i, 0, 0)),    # keys
            pl.BlockSpec((E, H1p), lambda i: (0, 0)),         # W1 split: k term
            pl.BlockSpec((E, H1p), lambda i: (0, 0)),         # W1 split: q*k term
            pl.BlockSpec((E, H1p), lambda i: (0, 0)),         # W1 split: q term
            pl.BlockSpec((1, H1p), lambda i: (0, 0)),         # b1
            pl.BlockSpec((H1p, H2p), lambda i: (0, 0)),       # W2
            pl.BlockSpec((1, H2p), lambda i: (0, 0)),         # b2
            pl.BlockSpec((H2p, 1), lambda i: (0, 0)),         # W3
            pl.BlockSpec(memory_space=pltpu.MemorySpace.SMEM),  # b3 scalar
        ],
        out_specs=pl.BlockSpec((BB, E), lambda i: (i, 0)),
        compiler_params=pltpu.CompilerParams(
            dimension_semantics=("parallel",)),
    )(kl2, q2, k2, w1k, w1p, w1q, b1p, w2p, b2p, w3p, b3s)

    return out[:B].reshape(B, 1, E)


# --------------------------------------------------------------------------- #
# Plain-JAX reference (mirrors the PyTorch forward, weight_normalization=False)
# --------------------------------------------------------------------------- #
def reference_forward(query, keys, keys_length, params):
    w1, b1, w2, b2, w3, b3 = params
    B, T, E = keys.shape
    q = jnp.broadcast_to(query, (B, T, E))
    att_in = jnp.concatenate([q, keys, q - keys, q * keys], axis=-1)
    h = jax.nn.sigmoid(att_in @ w1 + b1)
    h = jax.nn.sigmoid(h @ w2 + b2)
    score = h @ w3 + b3                                    # (B, T, 1)
    outputs = jnp.transpose(score, (0, 2, 1))              # (B, 1, T)
    mask = (jnp.arange(T)[None, :] < keys_length[:, None])[:, None, :]
    outputs = jnp.where(mask, outputs, jnp.zeros_like(outputs))
    return jnp.matmul(outputs, keys)                       # (B, 1, E)


if __name__ == "__main__":
    # Small shapes consistent with the module: embedding_dim=8, att_hidden_units=(80, 40)
    B, T, E = 2, 16, 8
    H1, H2 = 80, 40

    key = jax.random.PRNGKey(0)
    k_q, k_k, k_w1, k_b1, k_w2, k_b2, k_w3, k_b3 = jax.random.split(key, 8)

    query = jax.random.normal(k_q, (B, 1, E), dtype=jnp.float32)
    keys = jax.random.normal(k_k, (B, T, E), dtype=jnp.float32)
    keys_length = jnp.array([5, T], dtype=jnp.int32)

    # Deterministic parameter init (AttentionUnit: DNN(4E->80->40) + Linear(40->1)).
    w1 = jax.random.normal(k_w1, (4 * E, H1), dtype=jnp.float32) * 0.1
    b1 = jax.random.normal(k_b1, (1, H1), dtype=jnp.float32) * 0.1
    w2 = jax.random.normal(k_w2, (H1, H2), dtype=jnp.float32) * 0.1
    b2 = jax.random.normal(k_b2, (1, H2), dtype=jnp.float32) * 0.1
    w3 = jax.random.normal(k_w3, (H2, 1), dtype=jnp.float32) * 0.1
    b3 = jax.random.normal(k_b3, (1, 1), dtype=jnp.float32) * 0.1
    params = (w1, b1, w2, b2, w3, b3)

    out = hist_attention_seq_pooling(query, keys, keys_length, params)
    out = jax.block_until_ready(out)

    ref = reference_forward(query, keys, keys_length, params)
    assert out.shape == (B, 1, E)

    if _matmul_dtype() == jnp.bfloat16:
        rtol, atol = 5e-2, 5e-2     # bf16 matmul operands (f32 accumulation)
    else:
        rtol, atol = 1e-5, 1e-4
    assert jnp.allclose(out, ref, rtol=rtol, atol=atol), "mismatch vs JAX reference"

    print("KERNEL_OK")
</pallas_src>

<mosaic_0001>
module attributes {stable_mosaic.version = 11 : i64} {
  func.func @_din_pool_kernel(%arg0: i32, %arg1: memref<2x1xi32, #tpu.memory_space<vmem>>, %arg2: memref<2x8xf32, #tpu.memory_space<vmem>>, %arg3: memref<2x16x8xf32, #tpu.memory_space<vmem>>, %arg4: memref<8x128xf32, #tpu.memory_space<vmem>>, %arg5: memref<8x128xf32, #tpu.memory_space<vmem>>, %arg6: memref<8x128xf32, #tpu.memory_space<vmem>>, %arg7: memref<1x128xf32, #tpu.memory_space<vmem>>, %arg8: memref<128x128xf32, #tpu.memory_space<vmem>>, %arg9: memref<1x128xf32, #tpu.memory_space<vmem>>, %arg10: memref<128x1xf32, #tpu.memory_space<vmem>>, %arg11: memref<1xf32, #tpu.memory_space<smem>>, %arg12: memref<2x8xf32, #tpu.memory_space<vmem>>) attributes {dimension_semantics = [#tpu.dimension_semantics<parallel>], iteration_bounds = array<i64: 1>, scalar_prefetch = 0 : i64, scratch_operands = 0 : i64, tpu.core_type = #tpu.core_type<tc>, window_params = [{transform_indices = @transform_0, window_bounds = array<i64: 2, 1>}, {transform_indices = @transform_1, window_bounds = array<i64: 2, 8>}, {transform_indices = @transform_2, window_bounds = array<i64: 2, 16, 8>}, {pipeline_mode = #tpu.pipeline_mode<synchronous>, transform_indices = @transform_3, window_bounds = array<i64: 8, 128>}, {pipeline_mode = #tpu.pipeline_mode<synchronous>, transform_indices = @transform_4, window_bounds = array<i64: 8, 128>}, {pipeline_mode = #tpu.pipeline_mode<synchronous>, transform_indices = @transform_5, window_bounds = array<i64: 8, 128>}, {pipeline_mode = #tpu.pipeline_mode<synchronous>, transform_indices = @transform_6, window_bounds = array<i64: 1, 128>}, {pipeline_mode = #tpu.pipeline_mode<synchronous>, transform_indices = @transform_7, window_bounds = array<i64: 128, 128>}, {pipeline_mode = #tpu.pipeline_mode<synchronous>, transform_indices = @transform_8, window_bounds = array<i64: 1, 128>}, {pipeline_mode = #tpu.pipeline_mode<synchronous>, transform_indices = @transform_9, window_bounds = array<i64: 128, 1>}, {transform_indices = @transform_10, window_bounds = array<i64: 1>}, {transform_indices = @transform_11, window_bounds = array<i64: 2, 8>}]} {
    %c0 = arith.constant 0 : index
    %c0_0 = arith.constant 0 : index
    %c0_1 = arith.constant 0 : index
    %0 = vector.load %arg3[%c0, %c0_0, %c0_1] : memref<2x16x8xf32, #tpu.memory_space<vmem>>, vector<2x16x8xf32>
    %c0_2 = arith.constant 0 : index
    %c0_3 = arith.constant 0 : index
    %1 = vector.load %arg2[%c0_2, %c0_3] : memref<2x8xf32, #tpu.memory_space<vmem>>, vector<2x8xf32>
    %2 = vector.shape_cast %0 : vector<2x16x8xf32> to vector<32x8xf32>
    %3 = vector.shape_cast %1 : vector<2x8xf32> to vector<2x1x8xf32>
    %4 = vector.broadcast %3 : vector<2x1x8xf32> to vector<2x16x8xf32>
    %5 = arith.mulf %4, %0 : vector<2x16x8xf32>
    %6 = vector.shape_cast %5 : vector<2x16x8xf32> to vector<32x8xf32>
    %c0_4 = arith.constant 0 : index
    %c0_5 = arith.constant 0 : index
    %7 = vector.load %arg4[%c0_4, %c0_5] : memref<8x128xf32, #tpu.memory_space<vmem>>, vector<8x128xf32>
    %cst = arith.constant dense<0.000000e+00> : vector<32x128xf32>
    %8 = tpu.matmul %2, %7, %cst {dimension_numbers = #tpu.dot_dimension_numbers<[1], [0], [0], [1], [0, 0, 1, 1], [], []>} : vector<32x8xf32>, vector<8x128xf32>, vector<32x128xf32> -> vector<32x128xf32>
    %c0_6 = arith.constant 0 : index
    %c0_7 = arith.constant 0 : index
    %9 = vector.load %arg5[%c0_6, %c0_7] : memref<8x128xf32, #tpu.memory_space<vmem>>, vector<8x128xf32>
    %cst_8 = arith.constant dense<0.000000e+00> : vector<32x128xf32>
    %10 = tpu.matmul %6, %9, %cst_8 {dimension_numbers = #tpu.dot_dimension_numbers<[1], [0], [0], [1], [0, 0, 1, 1], [], []>} : vector<32x8xf32>, vector<8x128xf32>, vector<32x128xf32> -> vector<32x128xf32>
    %11 = arith.addf %8, %10 : vector<32x128xf32>
    %c0_9 = arith.constant 0 : index
    %c0_10 = arith.constant 0 : index
    %12 = vector.load %arg6[%c0_9, %c0_10] : memref<8x128xf32, #tpu.memory_space<vmem>>, vector<8x128xf32>
    %cst_11 = arith.constant dense<0.000000e+00> : vector<2x128xf32>
    %13 = tpu.matmul %1, %12, %cst_11 {dimension_numbers = #tpu.dot_dimension_numbers<[1], [0], [0], [1], [0, 0, 1, 1], [], []>} : vector<2x8xf32>, vector<8x128xf32>, vector<2x128xf32> -> vector<2x128xf32>
    %14 = vector.shape_cast %11 : vector<32x128xf32> to vector<2x16x128xf32>
    %15 = vector.shape_cast %13 : vector<2x128xf32> to vector<2x1x128xf32>
    %16 = vector.broadcast %15 : vector<2x1x128xf32> to vector<2x16x128xf32>
    %17 = arith.addf %14, %16 : vector<2x16x128xf32>
    %c0_12 = arith.constant 0 : index
    %c0_13 = arith.constant 0 : index
    %18 = vector.load %arg7[%c0_12, %c0_13] : memref<1x128xf32, #tpu.memory_space<vmem>>, vector<1x128xf32>
    %19 = vector.shape_cast %18 : vector<1x128xf32> to vector<1x1x128xf32>
    %20 = vector.broadcast %19 : vector<1x1x128xf32> to vector<2x16x128xf32>
    %21 = arith.addf %17, %20 : vector<2x16x128xf32>
    %22 = arith.negf %21 : vector<2x16x128xf32>
    %23 = math.exp %22 : vector<2x16x128xf32>
    %cst_14 = arith.constant 1.000000e+00 : f32
    %24 = vector.broadcast %cst_14 : f32 to vector<2x16x128xf32>
    %25 = arith.addf %24, %23 : vector<2x16x128xf32>
    %26 = arith.divf %24, %25 : vector<2x16x128xf32>
    %27 = vector.shape_cast %26 : vector<2x16x128xf32> to vector<32x128xf32>
    %c0_15 = arith.constant 0 : index
    %c0_16 = arith.constant 0 : index
    %28 = vector.load %arg8[%c0_15, %c0_16] : memref<128x128xf32, #tpu.memory_space<vmem>>, vector<128x128xf32>
    %cst_17 = arith.constant dense<0.000000e+00> : vector<32x128xf32>
    %29 = tpu.matmul %27, %28, %cst_17 {dimension_numbers = #tpu.dot_dimension_numbers<[1], [0], [0], [1], [0, 0, 1, 1], [], []>} : vector<32x128xf32>, vector<128x128xf32>, vector<32x128xf32> -> vector<32x128xf32>
    %c0_18 = arith.constant 0 : index
    %c0_19 = arith.constant 0 : index
    %30 = vector.load %arg9[%c0_18, %c0_19] : memref<1x128xf32, #tpu.memory_space<vmem>>, vector<1x128xf32>
    %31 = vector.broadcast %30 : vector<1x128xf32> to vector<32x128xf32>
    %32 = arith.addf %29, %31 : vector<32x128xf32>
    %33 = arith.negf %32 : vector<32x128xf32>
    %34 = math.exp %33 : vector<32x128xf32>
    %cst_20 = arith.constant 1.000000e+00 : f32
    %35 = vector.broadcast %cst_20 : f32 to vector<32x128xf32>
    %36 = arith.addf %35, %34 : vector<32x128xf32>
    %37 = arith.divf %35, %36 : vector<32x128xf32>
    %c0_21 = arith.constant 0 : index
    %c0_22 = arith.constant 0 : index
    %38 = vector.load %arg10[%c0_21, %c0_22] : memref<128x1xf32, #tpu.memory_space<vmem>>, vector<128x1xf32>
    %cst_23 = arith.constant dense<0.000000e+00> : vector<32x1xf32>
    %39 = tpu.matmul %37, %38, %cst_23 {dimension_numbers = #tpu.dot_dimension_numbers<[1], [0], [0], [1], [0, 0, 1, 1], [], []>} : vector<32x128xf32>, vector<128x1xf32>, vector<32x1xf32> -> vector<32x1xf32>
    %40 = vector.shape_cast %39 : vector<32x1xf32> to vector<2x16x1xf32>
    %c0_24 = arith.constant 0 : index
    %41 = memref.load %arg11[%c0_24] : memref<1xf32, #tpu.memory_space<smem>>
    %42 = vector.broadcast %41 : f32 to vector<2x16x1xf32>
    %43 = arith.addf %40, %42 : vector<2x16x1xf32>
    %44 = tpu.iota {dimensions = array<i32: 1>} : vector<2x16x1xi32>
    %c0_25 = arith.constant 0 : index
    %c0_26 = arith.constant 0 : index
    %45 = vector.load %arg1[%c0_25, %c0_26] : memref<2x1xi32, #tpu.memory_space<vmem>>, vector<2x1xi32>
    %46 = vector.shape_cast %45 : vector<2x1xi32> to vector<2x1x1xi32>
    %47 = vector.broadcast %46 : vector<2x1x1xi32> to vector<2x16x1xi32>
    %48 = arith.cmpi slt, %44, %47 : vector<2x16x1xi32>
    %cst_27 = arith.constant 0.000000e+00 : f32
    %49 = vector.broadcast %cst_27 : f32 to vector<2x16x1xf32>
    %50 = arith.select %48, %43, %49 : vector<2x16x1xi1>, vector<2x16x1xf32>
    %51 = vector.broadcast %50 : vector<2x16x1xf32> to vector<2x16x8xf32>
    %52 = arith.mulf %51, %0 : vector<2x16x8xf32>
    %cst_28 = arith.constant dense<0.000000e+00> : vector<2x8xf32>
    %53 = vector.multi_reduction <add>, %52, %cst_28 [1] : vector<2x16x8xf32> to vector<2x8xf32>
    %c0_29 = arith.constant 0 : index
    %c0_30 = arith.constant 0 : index
    %54 = vector.load %arg12[%c0_29, %c0_30] : memref<2x8xf32, #tpu.memory_space<vmem>>, vector<2x8xf32>
    tpu.vector_store %arg12[%c0_29, %c0_30], %53 {strides = array<i32>} : memref<2x8xf32, #tpu.memory_space<vmem>>, vector<2x8xf32>,
    return
  }
  func.func @transform_0(%arg0: i32) -> (i32, i32) {
    %c0_i32 = arith.constant 0 : i32
    %c0_i32_0 = arith.constant 0 : i32
    return %arg0, %c0_i32 : i32, i32
  }
  func.func @transform_1(%arg0: i32) -> (i32, i32) {
    %c0_i32 = arith.constant 0 : i32
    %c0_i32_0 = arith.constant 0 : i32
    return %arg0, %c0_i32 : i32, i32
  }
  func.func @transform_2(%arg0: i32) -> (i32, i32, i32) {
    %c0_i32 = arith.constant 0 : i32
    %c0_i32_0 = arith.constant 0 : i32
    %c0_i32_1 = arith.constant 0 : i32
    return %arg0, %c0_i32, %c0_i32_0 : i32, i32, i32
  }
  func.func @transform_3(%arg0: i32) -> (i32, i32) {
    %c0_i32 = arith.constant 0 : i32
    %c0_i32_0 = arith.constant 0 : i32
    %c0_i32_1 = arith.constant 0 : i32
    return %c0_i32, %c0_i32_0 : i32, i32
  }
  func.func @transform_4(%arg0: i32) -> (i32, i32) {
    %c0_i32 = arith.constant 0 : i32
    %c0_i32_0 = arith.constant 0 : i32
    %c0_i32_1 = arith.constant 0 : i32
    return %c0_i32, %c0_i32_0 : i32, i32
  }
  func.func @transform_5(%arg0: i32) -> (i32, i32) {
    %c0_i32 = arith.constant 0 : i32
    %c0_i32_0 = arith.constant 0 : i32
    %c0_i32_1 = arith.constant 0 : i32
    return %c0_i32, %c0_i32_0 : i32, i32
  }
  func.func @transform_6(%arg0: i32) -> (i32, i32) {
    %c0_i32 = arith.constant 0 : i32
    %c0_i32_0 = arith.constant 0 : i32
    %c0_i32_1 = arith.constant 0 : i32
    return %c0_i32, %c0_i32_0 : i32, i32
  }
  func.func @transform_7(%arg0: i32) -> (i32, i32) {
    %c0_i32 = arith.constant 0 : i32
    %c0_i32_0 = arith.constant 0 : i32
    %c0_i32_1 = arith.constant 0 : i32
    return %c0_i32, %c0_i32_0 : i32, i32
  }
  func.func @transform_8(%arg0: i32) -> (i32, i32) {
    %c0_i32 = arith.constant 0 : i32
    %c0_i32_0 = arith.constant 0 : i32
    %c0_i32_1 = arith.constant 0 : i32
    return %c0_i32, %c0_i32_0 : i32, i32
  }
  func.func @transform_9(%arg0: i32) -> (i32, i32) {
    %c0_i32 = arith.constant 0 : i32
    %c0_i32_0 = arith.constant 0 : i32
    %c0_i32_1 = arith.constant 0 : i32
    return %c0_i32, %c0_i32_0 : i32, i32
  }
  func.func @transform_10(%arg0: i32) -> i32 {
    %c0_i32 = arith.constant 0 : i32
    %c0_i32_0 = arith.constant 0 : i32
    return %c0_i32 : i32
  }
  func.func @transform_11(%arg0: i32) -> (i32, i32) {
    %c0_i32 = arith.constant 0 : i32
    %c0_i32_0 = arith.constant 0 : i32
    return %arg0, %c0_i32 : i32, i32
  }
}

</mosaic_0001>

<llo_original>
// kernel: tpu_custom_call.1
$region0: #{tpu_custom_call.1}
  #allocation0 [shape = 'u32[]', space=smem, size = 0x4, offset = 0x4, fixed_abs, tag = 'smem constant byte address 0x4 - core index']
  #allocation1 [shape = 'u32[144,128]{1,0:T(1,128)}', space=vmem, size = 0x12000, scoped, tag = 'internal scratch']
  #allocation2 [shape = 'f32[1]{0:T(128)S(6)}', space=smem, size = 0x200, scoped, tag = 'scoped memory for tpu_custom_call.1']
  %s0 = inlined_call_operand.vmem [shape: s32[2,1], index: 0, kind: input, shape index: {}]
  %s1 = inlined_call_operand.vmem [shape: f32[2,8], index: 1, kind: input, shape index: {}]
  %s2 = inlined_call_operand.vmem [shape: f32[2,16,8], index: 2, kind: input, shape index: {}]
  %s3 = inlined_call_operand.vmem [shape: f32[8,128], index: 3, kind: input, shape index: {}]
  %s4 = inlined_call_operand.vmem [shape: f32[8,128], index: 4, kind: input, shape index: {}]
  %s5 = inlined_call_operand.vmem [shape: f32[8,128], index: 5, kind: input, shape index: {}]
  %s6 = inlined_call_operand.vmem [shape: f32[1,128], index: 6, kind: input, shape index: {}]
  %s7 = inlined_call_operand.vmem [shape: f32[128,128], index: 7, kind: input, shape index: {}]
  %s8 = inlined_call_operand.vmem [shape: f32[1,128], index: 8, kind: input, shape index: {}]
  %s9 = inlined_call_operand.vmem [shape: f32[128,1], index: 9, kind: input, shape index: {}]
  %s10 = inlined_call_operand.<no memory space> [shape: f32[1], index: 10, kind: input, shape index: {}]
  %s11 = inlined_call_operand.hbm [shape: f32[2,8], index: 11, kind: output, shape index: {}]
  %s12 = sld [smem:[#allocation0]]
  $region54: #{tpu_custom_call.1} parent=0
    _
  %s14 = ssub.s32 1, %s12
  %s15 = scalar_select 0, %s14, %s12
  %16 = sst [smem:[#allocation2]] %s10
  $region1: #{tpu_custom_call.1} parent=0
    #allocation3 [shape = 'u8[1024]{0}', space=vmem, size = 0x400, scoped, tag = 'output window, operand 0, single buffered']
    #allocation4 [shape = 's32[1]{0}', space=sflag, size = 0x4, scoped, tag = 'scoped memory for tpu_custom_call.1']
    %17 = vsyncpa [#allocation4], 0
    // Predicated region
    $region2: #{tpu_custom_call.1} parent=1 // pred_check
      _
    $region3: #{tpu_custom_call.1} parent=1 // pred_check_branch
      %19 = sbr.rel (0) target = $region5
    $region4: #{tpu_custom_call.1} parent=1 // pred_region
      _
    $region5: #{tpu_custom_call.1} parent=1 // pred_fallthru
      _
    // Predicated region
    $region6: #{tpu_custom_call.1} parent=1 // pred_check
      _
    $region7: #{tpu_custom_call.1} parent=1 // pred_check_branch
      %21 = sbr.rel (0) target = $region9
    $region8: #{tpu_custom_call.1} parent=1 // pred_region
      _
    $region9: #{tpu_custom_call.1} parent=1 // pred_fallthru
      _
    // Predicated region
    $region10: #{tpu_custom_call.1} parent=1 // pred_check
      _
    $region11: #{tpu_custom_call.1} parent=1 // pred_check_branch
      %23 = sbr.rel (0) target = $region13
    $region12: #{tpu_custom_call.1} parent=1 // pred_region
      _
    $region13: #{tpu_custom_call.1} parent=1 // pred_fallthru
      _
    // Predicated region
    $region14: #{tpu_custom_call.1} parent=1 // pred_check
      _
    $region15: #{tpu_custom_call.1} parent=1 // pred_check_branch
      %25 = sbr.rel (0) target = $region17
    $region16: #{tpu_custom_call.1} parent=1 // pred_region
      _
    $region17: #{tpu_custom_call.1} parent=1 // pred_fallthru
      _
    // Predicated region
    $region18: #{tpu_custom_call.1} parent=1 // pred_check
      _
    $region19: #{tpu_custom_call.1} parent=1 // pred_check_branch
      %27 = sbr.rel (0) target = $region21
    $region20: #{tpu_custom_call.1} parent=1 // pred_region
      _
    $region21: #{tpu_custom_call.1} parent=1 // pred_fallthru
      _
    // Predicated region
    $region22: #{tpu_custom_call.1} parent=1 // pred_check
      _
    $region23: #{tpu_custom_call.1} parent=1 // pred_check_branch
      %29 = sbr.rel (0) target = $region25
    $region24: #{tpu_custom_call.1} parent=1 // pred_region
      _
    $region25: #{tpu_custom_call.1} parent=1 // pred_fallthru
      _
    // Predicated region
    $region26: #{tpu_custom_call.1} parent=1 // pred_check
      _
    $region27: #{tpu_custom_call.1} parent=1 // pred_check_branch
      %31 = sbr.rel (0) target = $region29
    $region28: #{tpu_custom_call.1} parent=1 // pred_region
      _
    $region29: #{tpu_custom_call.1} parent=1 // pred_fallthru
      _
    // Predicated region
    $region30: #{tpu_custom_call.1} parent=1 // pred_check
      _
    $region31: #{tpu_custom_call.1} parent=1 // pred_check_branch
      %33 = sbr.rel (0) target = $region33
    $region32: #{tpu_custom_call.1} parent=1 // pred_region
      _
    $region33: #{tpu_custom_call.1} parent=1 // pred_fallthru
      _
    // Predicated region
    $region34: #{tpu_custom_call.1} parent=1 // pred_check
      _
    $region35: #{tpu_custom_call.1} parent=1 // pred_check_branch
      %35 = sbr.rel (0) target = $region37
    $region36: #{tpu_custom_call.1} parent=1 // pred_region
      _
    $region37: #{tpu_custom_call.1} parent=1 // pred_fallthru
      _
    // Predicated region
    $region38: #{tpu_custom_call.1} parent=1 // pred_check
      _
    $region39: #{tpu_custom_call.1} parent=1 // pred_check_branch
      %37 = sbr.rel (0) target = $region41
    $region40: #{tpu_custom_call.1} parent=1 // pred_region
      _
    $region41: #{tpu_custom_call.1} parent=1 // pred_fallthru
      _
    // Predicated region
    $region42: #{tpu_custom_call.1} parent=1 // pred_check
      _
    $region43: #{tpu_custom_call.1} parent=1 // pred_check_branch
      %39 = sbr.rel (0) target = $region45
    $region44: #{tpu_custom_call.1} parent=1 // pred_region
      _
    $region45: #{tpu_custom_call.1} parent=1 // pred_fallthru
      _
    %v40 = vld [vmem:[%s2] sm:$0xff]
    %v41 = vld [vmem:[%s2 + $0x8] sm:$0xff]
    %v42 = vld [vmem:[%s2 + $0x10] sm:$0xff]
    %v43 = vld [vmem:[%s2 + $0x18] sm:$0xff]
    %v44 = vld [vmem:[%s1] sm:$0x3]
    %v47 = vunpack.c.l.s4 1966171168
    %v48 = vunpack.c.0.s8 %v47
    %v49 = vlaneseq
    %v50 = vshrl.u32 %v49, 7
    %v51 = vsub.s32 %v48, %v50
    %v52 = vrot.slane %v44, %v51
    %v53 = vcombine.high %v52, %v52
    %v55 = vunpack.c.l.s4 1966171168
    %v56 = vunpack.c.0.s8 %v55
    %v57 = vlaneseq
    %v58 = vshrl.u32 %v57, 7
    %v59 = vsub.s32 %v56, %v58
    %v60 = vrot.slane %v52, %v59
    %v62 = vunpack.c.l.s4 1966171168
    %v63 = vunpack.c.0.s8 %v62
    %v64 = vlaneseq
    %v65 = vshrl.u32 %v64, 7
    %v66 = vsub.s32 %v63, %v65
    %v67 = vrot.slane %v53, %v66
    %v68 = vlaneseq
    %v69 = vshrl.u32 %v68, 7
    %v70 = vsub.s32 0, %v69
    %v71 = vrot.slane %v60, %v70
    %v72 = vlaneseq
    %v73 = vshrl.u32 %v72, 7
    %v74 = vsub.s32 0, %v73
    %v75 = vrot.slane %v67, %v74
    %v78 = vmul.f32 %v71, %v40
    %v79 = vmul.f32 %v71, %v41
    %v80 = vmul.f32 %v75, %v42
    %v81 = vmul.f32 %v75, %v43
    %v82 = vld [vmem:[%s3] sm:$0xff]
    %v83 = vld [vmem:[%s4] sm:$0xff]
    %vm84 = vcmask 64512
    %v86 = vsel %vm84, %v78, 0
    %v89 = vsel %vm84, %v79, 0
    %v92 = vsel %vm84, %v80, 0
    %v95 = vsel %vm84, %v81, 0
    %97 = vmatprep.subr.mxu0 0.0
    %98 = vmatpush1.msra.mxu0 %v83
    %99 = vmatprep.subr.mxu0 0.0
    %100 = vmatpush1.msra.mxu0 0.0
    %101 = vmatprep.subr.mxu0 0.0
    %102 = vmatpush1.msra.mxu0 0.0
    %103 = vmatprep.subr.mxu0 0.0
    %104 = vmatpush1.msra.mxu0 0.0
    %105 = vmatprep.subr.mxu0 0.0
    %106 = vmatpush1.msra.mxu0 0.0
    %107 = vmatprep.subr.mxu0 0.0
    %108 = vmatpush1.msra.mxu0 0.0
    %109 = vmatprep.subr.mxu0 0.0
    %110 = vmatpush1.msra.mxu0 0.0
    %111 = vmatprep.subr.mxu0 0.0
    %112 = vmatpush1.msra.mxu0 0.0
    %113 = vmatprep.subr.mxu0 0.0
    %114 = vmatpush1.msra.mxu0 0.0
    %115 = vmatprep.subr.mxu0 0.0
    %116 = vmatpush1.msra.mxu0 0.0
    %117 = vmatprep.subr.mxu0 0.0
    %118 = vmatpush1.msra.mxu0 0.0
    %119 = vmatprep.subr.mxu0 0.0
    %120 = vmatpush1.msra.mxu0 0.0
    %121 = vmatprep.subr.mxu0 0.0
    %122 = vmatpush1.msra.mxu0 0.0
    %123 = vmatprep.subr.mxu0 0.0
    %124 = vmatpush1.msra.mxu0 0.0
    %125 = vmatprep.subr.mxu0 0.0
    %126 = vmatpush1.msra.mxu0 0.0
    %127 = vmatprep.subr.mxu0 0.0
    %128 = vmatpush1.msra.mxu0 0.0
    %129 = vmatprep.subr.mxu0 0.0
    %130 = vmatpush1.msra.mxu0 0.0
    %131 = vmatprep.subr.mxu0 0.0
    %132 = vmatpush1.msra.mxu0 0.0
    %133 = vmatprep.subr.mxu0 0.0
    %134 = vmatpush1.msra.mxu0 0.0
    %135 = vmatprep.subr.mxu0 0.0
    %136 = vmatpush1.msra.mxu0 0.0
    %137 = vmatprep.subr.mxu0 0.0
    %138 = vmatpush1.msra.mxu0 0.0
    %139 = vmatprep.subr.mxu0 0.0
    %140 = vmatpush1.msra.mxu0 0.0
    %141 = vmatprep.subr.mxu0 0.0
    %142 = vmatpush1.msra.mxu0 0.0
    %143 = vmatprep.subr.mxu0 0.0
    %144 = vmatpush1.msra.mxu0 0.0
    %145 = vmatprep.subr.mxu0 0.0
    %146 = vmatpush1.msra.mxu0 0.0
    %147 = vmatprep.subr.mxu0 0.0
    %148 = vmatpush1.msra.mxu0 0.0
    %149 = vmatprep.subr.mxu0 0.0
    %150 = vmatpush1.msra.mxu0 0.0
    %151 = vmatprep.subr.mxu0 0.0
    %152 = vmatpush1.msra.mxu0 0.0
    %153 = vmatprep.subr.mxu0 0.0
    %154 = vmatpush1.msra.mxu0 0.0
    %155 = vmatprep.subr.mxu0 0.0
    %156 = vmatpush1.msra.mxu0 0.0
    %157 = vmatprep.subr.mxu0 0.0
    %158 = vmatpush1.msra.mxu0 0.0
    %159 = vmatprep.subr.mxu0 0.0
    %160 = vmatpush1.msra.mxu0 0.0
    %161 = vmatprep.mubr.f32.mxu0 0.0
    %162 = vmatmul.mubr.f32.gmra.mrb[0].mxu0 %v86
    %v163 = vpop.f32.mrb[0].mxu0
    %v164 = vadd.f32 0.0, %v163
    %v165 = vpop.f32.mrb[0].mxu0
    %166 = vmatprep.mubr.f32.mxu0 0.0
    %167 = vmatmul.mubr.f32.gmra.mrb[0].mxu0 %v89
    %v168 = vpop.f32.mrb[0].mxu0
    %v169 = vadd.f32 0.0, %v168
    %v170 = vpop.f32.mrb[0].mxu0
    %171 = vmatprep.mubr.f32.mxu0 0.0
    %172 = vmatmul.mubr.f32.gmra.mrb[0].mxu0 %v92
    %v173 = vpop.f32.mrb[0].mxu0
    %v174 = vadd.f32 0.0, %v173
    %v175 = vpop.f32.mrb[0].mxu0
    %176 = vmatprep.mubr.f32.mxu0 0.0
    %177 = vmatmul.mubr.f32.gmra.mrb[0].mxu0 %v95
    %v178 = vpop.f32.mrb[0].mxu0
    %v179 = vadd.f32 0.0, %v178
    %v180 = vpop.f32.mrb[0].mxu0
    %181 = vdwg.mxu0
    %v183 = vsel %vm84, %v40, 0
    %v186 = vsel %vm84, %v41, 0
    %v189 = vsel %vm84, %v42, 0
    %v192 = vsel %vm84, %v43, 0
    %194 = vmatprep.subr.mxu0 0.0
    %195 = vmatpush1.msra.mxu0 %v82
    %196 = vmatprep.subr.mxu0 0.0
    %197 = vmatpush1.msra.mxu0 0.0
    %198 = vmatprep.subr.mxu0 0.0
    %199 = vmatpush1.msra.mxu0 0.0
    %200 = vmatprep.subr.mxu0 0.0
    %201 = vmatpush1.msra.mxu0 0.0
    %202 = vmatprep.subr.mxu0 0.0
    %203 = vmatpush1.msra.mxu0 0.0
    %204 = vmatprep.subr.mxu0 0.0
    %205 = vmatpush1.msra.mxu0 0.0
    %206 = vmatprep.subr.mxu0 0.0
    %207 = vmatpush1.msra.mxu0 0.0
    %208 = vmatprep.subr.mxu0 0.0
    %209 = vmatpush1.msra.mxu0 0.0
    %210 = vmatprep.subr.mxu0 0.0
    %211 = vmatpush1.msra.mxu0 0.0
    %212 = vmatprep.subr.mxu0 0.0
    %213 = vmatpush1.msra.mxu0 0.0
    %214 = vmatprep.subr.mxu0 0.0
    %215 = vmatpush1.msra.mxu0 0.0
    %216 = vmatprep.subr.mxu0 0.0
    %217 = vmatpush1.msra.mxu0 0.0
    %218 = vmatprep.subr.mxu0 0.0
    %219 = vmatpush1.msra.mxu0 0.0
    %220 = vmatprep.subr.mxu0 0.0
    %221 = vmatpush1.msra.mxu0 0.0
    %222 = vmatprep.subr.mxu0 0.0
    %223 = vmatpush1.msra.mxu0 0.0
    %224 = vmatprep.subr.mxu0 0.0
    %225 = vmatpush1.msra.mxu0 0.0
    %226 = vmatprep.subr.mxu0 0.0
    %227 = vmatpush1.msra.mxu0 0.0
    %228 = vmatprep.subr.mxu0 0.0
    %229 = vmatpush1.msra.mxu0 0.0
    %230 = vmatprep.subr.mxu0 0.0
    %231 = vmatpush1.msra.mxu0 0.0
    %232 = vmatprep.subr.mxu0 0.0
    %233 = vmatpush1.msra.mxu0 0.0
    %234 = vmatprep.subr.mxu0 0.0
    %235 = vmatpush1.msra.mxu0 0.0
    %236 = vmatprep.subr.mxu0 0.0
    %237 = vmatpush1.msra.mxu0 0.0
    %238 = vmatprep.subr.mxu0 0.0
    %239 = vmatpush1.msra.mxu0 0.0
    %240 = vmatprep.subr.mxu0 0.0
    %241 = vmatpush1.msra.mxu0 0.0
    %242 = vmatprep.subr.mxu0 0.0
    %243 = vmatpush1.msra.mxu0 0.0
    %244 = vmatprep.subr.mxu0 0.0
    %245 = vmatpush1.msra.mxu0 0.0
    %246 = vmatprep.subr.mxu0 0.0
    %247 = vmatpush1.msra.mxu0 0.0
    %248 = vmatprep.subr.mxu0 0.0
    %249 = vmatpush1.msra.mxu0 0.0
    %250 = vmatprep.subr.mxu0 0.0
    %251 = vmatpush1.msra.mxu0 0.0
    %252 = vmatprep.subr.mxu0 0.0
    %253 = vmatpush1.msra.mxu0 0.0
    %254 = vmatprep.subr.mxu0 0.0
    %255 = vmatpush1.msra.mxu0 0.0
    %256 = vmatprep.subr.mxu0 0.0
    %257 = vmatpush1.msra.mxu0 0.0
    %258 = vmatprep.mubr.f32.mxu0 0.0
    %259 = vmatmul.mubr.f32.gmra.mrb[0].mxu0 %v183
    %v260 = vpop.f32.mrb[0].mxu0
    %v261 = vadd.f32 %v164, %v260
    %v262 = vpop.f32.mrb[0].mxu0
    %263 = vmatprep.mubr.f32.mxu0 0.0
    %264 = vmatmul.mubr.f32.gmra.mrb[0].mxu0 %v186
    %v265 = vpop.f32.mrb[0].mxu0
    %v266 = vadd.f32 %v169, %v265
    %v267 = vpop.f32.mrb[0].mxu0
    %268 = vmatprep.mubr.f32.mxu0 0.0
    %269 = vmatmul.mubr.f32.gmra.mrb[0].mxu0 %v189
    %v270 = vpop.f32.mrb[0].mxu0
    %v271 = vadd.f32 %v174, %v270
    %v272 = vpop.f32.mrb[0].mxu0
    %273 = vmatprep.mubr.f32.mxu0 0.0
    %274 = vmatmul.mubr.f32.gmra.mrb[0].mxu0 %v192
    %v275 = vpop.f32.mrb[0].mxu0
    %v276 = vadd.f32 %v179, %v275
    %v277 = vpop.f32.mrb[0].mxu0
    %278 = vdwg.mxu0
    %v279 = vld [vmem:[%s5] sm:$0xff]
    %v280 = vsel %vm84, %v44, 0
    %282 = vmatprep.subr.mxu0 0.0
    %283 = vmatpush1.msra.mxu0 %v279
    %284 = vmatprep.subr.mxu0 0.0
    %285 = vmatpush1.msra.mxu0 0.0
    %286 = vmatprep.subr.mxu0 0.0
    %287 = vmatpush1.msra.mxu0 0.0
    %288 = vmatprep.subr.mxu0 0.0
    %289 = vmatpush1.msra.mxu0 0.0
    %290 = vmatprep.subr.mxu0 0.0
    %291 = vmatpush1.msra.mxu0 0.0
    %292 = vmatprep.subr.mxu0 0.0
    %293 = vmatpush1.msra.mxu0 0.0
    %294 = vmatprep.subr.mxu0 0.0
    %295 = vmatpush1.msra.mxu0 0.0
    %296 = vmatprep.subr.mxu0 0.0
    %297 = vmatpush1.msra.mxu0 0.0
    %298 = vmatprep.subr.mxu0 0.0
    %299 = vmatpush1.msra.mxu0 0.0
    %300 = vmatprep.subr.mxu0 0.0
    %301 = vmatpush1.msra.mxu0 0.0
    %302 = vmatprep.subr.mxu0 0.0
    %303 = vmatpush1.msra.mxu0 0.0
    %304 = vmatprep.subr.mxu0 0.0
    %305 = vmatpush1.msra.mxu0 0.0
    %306 = vmatprep.subr.mxu0 0.0
    %307 = vmatpush1.msra.mxu0 0.0
    %308 = vmatprep.subr.mxu0 0.0
    %309 = vmatpush1.msra.mxu0 0.0
    %310 = vmatprep.subr.mxu0 0.0
    %311 = vmatpush1.msra.mxu0 0.0
    %312 = vmatprep.subr.mxu0 0.0
    %313 = vmatpush1.msra.mxu0 0.0
    %314 = vmatprep.subr.mxu0 0.0
    %315 = vmatpush1.msra.mxu0 0.0
    %316 = vmatprep.subr.mxu0 0.0
    %317 = vmatpush1.msra.mxu0 0.0
    %318 = vmatprep.subr.mxu0 0.0
    %319 = vmatpush1.msra.mxu0 0.0
    %320 = vmatprep.subr.mxu0 0.0
    %321 = vmatpush1.msra.mxu0 0.0
    %322 = vmatprep.subr.mxu0 0.0
    %323 = vmatpush1.msra.mxu0 0.0
    %324 = vmatprep.subr.mxu0 0.0
    %325 = vmatpush1.msra.mxu0 0.0
    %326 = vmatprep.subr.mxu0 0.0
    %327 = vmatpush1.msra.mxu0 0.0
    %328 = vmatprep.subr.mxu0 0.0
    %329 = vmatpush1.msra.mxu0 0.0
    %330 = vmatprep.subr.mxu0 0.0
    %331 = vmatpush1.msra.mxu0 0.0
    %332 = vmatprep.subr.mxu0 0.0
    %333 = vmatpush1.msra.mxu0 0.0
    %334 = vmatprep.subr.mxu0 0.0
    %335 = vmatpush1.msra.mxu0 0.0
    %336 = vmatprep.subr.mxu0 0.0
    %337 = vmatpush1.msra.mxu0 0.0
    %338 = vmatprep.subr.mxu0 0.0
    %339 = vmatpush1.msra.mxu0 0.0
    %340 = vmatprep.subr.mxu0 0.0
    %341 = vmatpush1.msra.mxu0 0.0
    %342 = vmatprep.subr.mxu0 0.0
    %343 = vmatpush1.msra.mxu0 0.0
    %344 = vmatprep.subr.mxu0 0.0
    %345 = vmatpush1.msra.mxu0 0.0
    %346 = vmatprep.mubr.f32.mxu0 0.0
    %347 = vmatmul.mubr.f32.gmra.mrb[0].mxu0 %v280
    %v348 = vpop.f32.mrb[0].mxu0
    %v349 = vadd.f32 0.0, %v348
    %v350 = vpop.f32.mrb[0].mxu0
    %351 = vdwg.mxu0
    %v354 = vunpack.c.l.s4 1966171168
    %v355 = vunpack.c.0.s8 %v354
    %v356 = vlaneseq
    %v357 = vshrl.u32 %v356, 7
    %v358 = vsub.s32 %v355, %v357
    %v359 = vrot.slane %v349, %v358
    %v360 = vcombine.high %v359, %v359
    %v362 = vunpack.c.l.s4 1966171168
    %v363 = vunpack.c.0.s8 %v362
    %v364 = vlaneseq
    %v365 = vshrl.u32 %v364, 7
    %v366 = vsub.s32 %v363, %v365
    %v367 = vrot.slane %v359, %v366
    %v369 = vunpack.c.l.s4 1966171168
    %v370 = vunpack.c.0.s8 %v369
    %v371 = vlaneseq
    %v372 = vshrl.u32 %v371, 7
    %v373 = vsub.s32 %v370, %v372
    %v374 = vrot.slane %v360, %v373
    %v375 = vlaneseq
    %v376 = vshrl.u32 %v375, 7
    %v377 = vsub.s32 0, %v376
    %v378 = vrot.slane %v367, %v377
    %v379 = vlaneseq
    %v380 = vshrl.u32 %v379, 7
    %v381 = vsub.s32 0, %v380
    %v382 = vrot.slane %v374, %v381
    %v385 = vadd.f32 %v261, %v378
    %v386 = vadd.f32 %v266, %v378
    %v387 = vadd.f32 %v271, %v382
    %v388 = vadd.f32 %v276, %v382
    %v389 = vld [vmem:[%s6] sm:$0x1]
    %v391 = vlaneseq
    %v392 = vshrl.u32 %v391, 7
    %v393 = vsub.s32 0, %v392
    %v394 = vrot.slane %v389, %v393
    %v396 = vadd.f32 %v385, %v394
    %v397 = vadd.f32 %v386, %v394
    %v398 = vadd.f32 %v387, %v394
    %v399 = vadd.f32 %v388, %v394
    %v400 = vxor.u32 %v396, 2147483648
    %v401 = vxor.u32 %v397, 2147483648
    %v402 = vxor.u32 %v398, 2147483648
    %v403 = vxor.u32 %v399, 2147483648
    %v404 = vmul.f32 %v400, 1.442695
    %v405 = vpow.pop %v404
    %v406 = vmul.f32 %v401, 1.442695
    %v407 = vpow.pop %v406
    %v408 = vmul.f32 %v402, 1.442695
    %v409 = vpow.pop %v408
    %v410 = vmul.f32 %v403, 1.442695
    %v411 = vpow.pop %v410
    %v412 = vadd.f32 %v405, 1.0
    %v413 = vadd.f32 %v407, 1.0
    %v414 = vadd.f32 %v409, 1.0
    %v415 = vadd.f32 %v411, 1.0
    %v416 = vrcp.pop %v412
    %v417 = vmul.f32 1.0, %v416
    %v418 = vrcp.pop %v413
    %v419 = vmul.f32 1.0, %v418
    %v420 = vrcp.pop %v414
    %v421 = vmul.f32 1.0, %v420
    %v422 = vrcp.pop %v415
    %v423 = vmul.f32 1.0, %v422
    %v424 = vld [vmem:[%s7] sm:$0xff]
    %v425 = vld [vmem:[%s7 + $0x8] sm:$0xff]
    %v426 = vld [vmem:[%s7 + $0x10] sm:$0xff]
    %v427 = vld [vmem:[%s7 + $0x18] sm:$0xff]
    %v428 = vld [vmem:[%s7 + $0x20] sm:$0xff]
    %v429 = vld [vmem:[%s7 + $0x28] sm:$0xff]
    %v430 = vld [vmem:[%s7 + $0x30] sm:$0xff]
    %v431 = vld [vmem:[%s7 + $0x38] sm:$0xff]
    %v432 = vld [vmem:[%s7 + $0x40] sm:$0xff]
    %v433 = vld [vmem:[%s7 + $0x48] sm:$0xff]
    %v434 = vld [vmem:[%s7 + $0x50] sm:$0xff]
    %v435 = vld [vmem:[%s7 + $0x58] sm:$0xff]
    %v436 = vld [vmem:[%s7 + $0x60] sm:$0xff]
    %v437 = vld [vmem:[%s7 + $0x68] sm:$0xff]
    %v438 = vld [vmem:[%s7 + $0x70] sm:$0xff]
    %v439 = vld [vmem:[%s7 + $0x78] sm:$0xff]
    %v440 = vld [vmem:[%s8] sm:$0x1]
    %v442 = vlaneseq
    %v443 = vshrl.u32 %v442, 7
    %v444 = vsub.s32 0, %v443
    %v445 = vrot.slane %v440, %v444
    %447 = vmatprep.subr.mxu0 0.0
    %448 = vmatpush1.msra.mxu0 %v424
    %449 = vmatprep.subr.mxu0 0.0
    %450 = vmatpush1.msra.mxu0 %v425
    %451 = vmatprep.subr.mxu0 0.0
    %452 = vmatpush1.msra.mxu0 %v426
    %453 = vmatprep.subr.mxu0 0.0
    %454 = vmatpush1.msra.mxu0 %v427
    %455 = vmatprep.subr.mxu0 0.0
    %456 = vmatpush1.msra.mxu0 %v428
    %457 = vmatprep.subr.mxu0 0.0
    %458 = vmatpush1.msra.mxu0 %v429
    %459 = vmatprep.subr.mxu0 0.0
    %460 = vmatpush1.msra.mxu0 %v430
    %461 = vmatprep.subr.mxu0 0.0
    %462 = vmatpush1.msra.mxu0 %v431
    %463 = vmatprep.subr.mxu0 0.0
    %464 = vmatpush1.msra.mxu0 %v432
    %465 = vmatprep.subr.mxu0 0.0
    %466 = vmatpush1.msra.mxu0 %v433
    %467 = vmatprep.subr.mxu0 0.0
    %468 = vmatpush1.msra.mxu0 %v434
    %469 = vmatprep.subr.mxu0 0.0
    %470 = vmatpush1.msra.mxu0 %v435
    %471 = vmatprep.subr.mxu0 0.0
    %472 = vmatpush1.msra.mxu0 %v436
    %473 = vmatprep.subr.mxu0 0.0
    %474 = vmatpush1.msra.mxu0 %v437
    %475 = vmatprep.subr.mxu0 0.0
    %476 = vmatpush1.msra.mxu0 %v438
    %477 = vmatprep.subr.mxu0 0.0
    %478 = vmatpush1.msra.mxu0 %v439
    %479 = vmatprep.subr.mxu0 0.0
    %480 = vmatpush1.msra.mxu0 0.0
    %481 = vmatprep.subr.mxu0 0.0
    %482 = vmatpush1.msra.mxu0 0.0
    %483 = vmatprep.subr.mxu0 0.0
    %484 = vmatpush1.msra.mxu0 0.0
    %485 = vmatprep.subr.mxu0 0.0
    %486 = vmatpush1.msra.mxu0 0.0
    %487 = vmatprep.subr.mxu0 0.0
    %488 = vmatpush1.msra.mxu0 0.0
    %489 = vmatprep.subr.mxu0 0.0
    %490 = vmatpush1.msra.mxu0 0.0
    %491 = vmatprep.subr.mxu0 0.0
    %492 = vmatpush1.msra.mxu0 0.0
    %493 = vmatprep.subr.mxu0 0.0
    %494 = vmatpush1.msra.mxu0 0.0
    %495 = vmatprep.subr.mxu0 0.0
    %496 = vmatpush1.msra.mxu0 0.0
    %497 = vmatprep.subr.mxu0 0.0
    %498 = vmatpush1.msra.mxu0 0.0
    %499 = vmatprep.subr.mxu0 0.0
    %500 = vmatpush1.msra.mxu0 0.0
    %501 = vmatprep.subr.mxu0 0.0
    %502 = vmatpush1.msra.mxu0 0.0
    %503 = vmatprep.subr.mxu0 0.0
    %504 = vmatpush1.msra.mxu0 0.0
    %505 = vmatprep.subr.mxu0 0.0
    %506 = vmatpush1.msra.mxu0 0.0
    %507 = vmatprep.subr.mxu0 0.0
    %508 = vmatpush1.msra.mxu0 0.0
    %509 = vmatprep.subr.mxu0 0.0
    %510 = vmatpush1.msra.mxu0 0.0
    %511 = vmatprep.mubr.f32.mxu0 0.0
    %512 = vmatmul.mubr.f32.gmra.mrb[0].mxu0 %v417
    %v513 = vpop.f32.mrb[0].mxu0
    %v514 = vadd.f32 %v445, %v513
    %v515 = vpop.f32.mrb[0].mxu0
    %516 = vmatprep.mubr.f32.mxu0 0.0
    %517 = vmatmul.mubr.f32.gmra.mrb[0].mxu0 %v419
    %v518 = vpop.f32.mrb[0].mxu0
    %v519 = vadd.f32 %v445, %v518
    %v520 = vpop.f32.mrb[0].mxu0
    %521 = vmatprep.mubr.f32.mxu0 0.0
    %522 = vmatmul.mubr.f32.gmra.mrb[0].mxu0 %v421
    %v523 = vpop.f32.mrb[0].mxu0
    %v524 = vadd.f32 %v445, %v523
    %v525 = vpop.f32.mrb[0].mxu0
    %526 = vmatprep.mubr.f32.mxu0 0.0
    %527 = vmatmul.mubr.f32.gmra.mrb[0].mxu0 %v423
    %v528 = vpop.f32.mrb[0].mxu0
    %v529 = vadd.f32 %v445, %v528
    %v530 = vpop.f32.mrb[0].mxu0
    %531 = vdwg.mxu0
    %v532 = vxor.u32 %v514, 2147483648
    %v533 = vxor.u32 %v519, 2147483648
    %v534 = vxor.u32 %v524, 2147483648
    %v535 = vxor.u32 %v529, 2147483648
    %v536 = vmul.f32 %v532, 1.442695
    %v537 = vpow.pop %v536
    %v538 = vmul.f32 %v533, 1.442695
    %v539 = vpow.pop %v538
    %v540 = vmul.f32 %v534, 1.442695
    %v541 = vpow.pop %v540
    %v542 = vmul.f32 %v535, 1.442695
    %v543 = vpow.pop %v542
    %v544 = vadd.f32 %v537, 1.0
    %v545 = vadd.f32 %v539, 1.0
    %v546 = vadd.f32 %v541, 1.0
    %v547 = vadd.f32 %v543, 1.0
    %v548 = vrcp.pop %v544
    %v549 = vmul.f32 1.0, %v548
    %v550 = vrcp.pop %v545
    %v551 = vmul.f32 1.0, %v550
    %v552 = vrcp.pop %v546
    %v553 = vmul.f32 1.0, %v552
    %v554 = vrcp.pop %v547
    %v555 = vmul.f32 1.0, %v554
    %v556 = vld [vmem:[%s9] sm:$0xff]
    %v557 = vld [vmem:[%s9 + $0x8] sm:$0xff]
    %v558 = vld [vmem:[%s9 + $0x10] sm:$0xff]
    %v559 = vld [vmem:[%s9 + $0x18] sm:$0xff]
    %v560 = vld [vmem:[%s9 + $0x20] sm:$0xff]
    %v561 = vld [vmem:[%s9 + $0x28] sm:$0xff]
    %v562 = vld [vmem:[%s9 + $0x30] sm:$0xff]
    %v563 = vld [vmem:[%s9 + $0x38] sm:$0xff]
    %v564 = vld [vmem:[%s9 + $0x40] sm:$0xff]
    %v565 = vld [vmem:[%s9 + $0x48] sm:$0xff]
    %v566 = vld [vmem:[%s9 + $0x50] sm:$0xff]
    %v567 = vld [vmem:[%s9 + $0x58] sm:$0xff]
    %v568 = vld [vmem:[%s9 + $0x60] sm:$0xff]
    %v569 = vld [vmem:[%s9 + $0x68] sm:$0xff]
    %v570 = vld [vmem:[%s9 + $0x70] sm:$0xff]
    %v571 = vld [vmem:[%s9 + $0x78] sm:$0xff]
    %572 = vmatprep.subr.mxu0 0.0
    %573 = vmatpush1.msra.mxu0 %v556
    %574 = vmatprep.subr.mxu0 0.0
    %575 = vmatpush1.msra.mxu0 %v557
    %576 = vmatprep.subr.mxu0 0.0
    %577 = vmatpush1.msra.mxu0 %v558
    %578 = vmatprep.subr.mxu0 0.0
    %579 = vmatpush1.msra.mxu0 %v559
    %580 = vmatprep.subr.mxu0 0.0
    %581 = vmatpush1.msra.mxu0 %v560
    %582 = vmatprep.subr.mxu0 0.0
    %583 = vmatpush1.msra.mxu0 %v561
    %584 = vmatprep.subr.mxu0 0.0
    %585 = vmatpush1.msra.mxu0 %v562
    %586 = vmatprep.subr.mxu0 0.0
    %587 = vmatpush1.msra.mxu0 %v563
    %588 = vmatprep.subr.mxu0 0.0
    %589 = vmatpush1.msra.mxu0 %v564
    %590 = vmatprep.subr.mxu0 0.0
    %591 = vmatpush1.msra.mxu0 %v565
    %592 = vmatprep.subr.mxu0 0.0
    %593 = vmatpush1.msra.mxu0 %v566
    %594 = vmatprep.subr.mxu0 0.0
    %595 = vmatpush1.msra.mxu0 %v567
    %596 = vmatprep.subr.mxu0 0.0
    %597 = vmatpush1.msra.mxu0 %v568
    %598 = vmatprep.subr.mxu0 0.0
    %599 = vmatpush1.msra.mxu0 %v569
    %600 = vmatprep.subr.mxu0 0.0
    %601 = vmatpush1.msra.mxu0 %v570
    %602 = vmatprep.subr.mxu0 0.0
    %603 = vmatpush1.msra.mxu0 %v571
    %604 = vmatprep.subr.mxu0 0.0
    %605 = vmatpush1.msra.mxu0 0.0
    %606 = vmatprep.subr.mxu0 0.0
    %607 = vmatpush1.msra.mxu0 0.0
    %608 = vmatprep.subr.mxu0 0.0
    %609 = vmatpush1.msra.mxu0 0.0
    %610 = vmatprep.subr.mxu0 0.0
    %611 = vmatpush1.msra.mxu0 0.0
    %612 = vmatprep.subr.mxu0 0.0
    %613 = vmatpush1.msra.mxu0 0.0
    %614 = vmatprep.subr.mxu0 0.0
    %615 = vmatpush1.msra.mxu0 0.0
    %616 = vmatprep.subr.mxu0 0.0
    %617 = vmatpush1.msra.mxu0 0.0
    %618 = vmatprep.subr.mxu0 0.0
    %619 = vmatpush1.msra.mxu0 0.0
    %620 = vmatprep.subr.mxu0 0.0
    %621 = vmatpush1.msra.mxu0 0.0
    %622 = vmatprep.subr.mxu0 0.0
    %623 = vmatpush1.msra.mxu0 0.0
    %624 = vmatprep.subr.mxu0 0.0
    %625 = vmatpush1.msra.mxu0 0.0
    %626 = vmatprep.subr.mxu0 0.0
    %627 = vmatpush1.msra.mxu0 0.0
    %628 = vmatprep.subr.mxu0 0.0
    %629 = vmatpush1.msra.mxu0 0.0
    %630 = vmatprep.subr.mxu0 0.0
    %631 = vmatpush1.msra.mxu0 0.0
    %632 = vmatprep.subr.mxu0 0.0
    %633 = vmatpush1.msra.mxu0 0.0
    %634 = vmatprep.subr.mxu0 0.0
    %635 = vmatpush1.msra.mxu0 0.0
    %636 = vmatprep.mubr.f32.mxu0 0.0
    %637 = vmatmul.mubr.f32.gmra.mrb[0].mxu0 %v549
    %v638 = vpop.f32.mrb[0].mxu0
    %v639 = vadd.f32 0.0, %v638
    %v640 = vpop.f32.mrb[0].mxu0
    %641 = vmatprep.mubr.f32.mxu0 0.0
    %642 = vmatmul.mubr.f32.gmra.mrb[0].mxu0 %v551
    %v643 = vpop.f32.mrb[0].mxu0
    %v644 = vadd.f32 0.0, %v643
    %v645 = vpop.f32.mrb[0].mxu0
    %646 = vmatprep.mubr.f32.mxu0 0.0
    %647 = vmatmul.mubr.f32.gmra.mrb[0].mxu0 %v553
    %v648 = vpop.f32.mrb[0].mxu0
    %v649 = vadd.f32 0.0, %v648
    %v650 = vpop.f32.mrb[0].mxu0
    %651 = vmatprep.mubr.f32.mxu0 0.0
    %652 = vmatmul.mubr.f32.gmra.mrb[0].mxu0 %v555
    %v653 = vpop.f32.mrb[0].mxu0
    %v654 = vadd.f32 0.0, %v653
    %v655 = vpop.f32.mrb[0].mxu0
    %656 = vdwg.mxu0
    %s657 = sld [smem:[#allocation2]]
    %v658 = vstv %s657
    %v659 = vadd.f32 %v639, %v658
    %v660 = vadd.f32 %v644, %v658
    %v661 = vadd.f32 %v649, %v658
    %v662 = vadd.f32 %v654, %v658
    %v663 = vlaneseq
    %v664 = vshrl.u32 %v663, 7
    %v665 = vadd.s32 %v664, 8
    %v666 = vld [vmem:[%s0] sm:$0x3]
    %v668 = vunpack.c.l.s4 1966171168
    %v669 = vunpack.c.0.s8 %v668
    %v670 = vlaneseq
    %v671 = vshrl.u32 %v670, 7
    %v672 = vsub.s32 %v669, %v671
    %v673 = vrot.slane %v666, %v672
    %v674 = vcombine.high %v673, %v673
    %v676 = vunpack.c.l.s4 1966171168
    %v677 = vunpack.c.0.s8 %v676
    %v678 = vlaneseq
    %v679 = vshrl.u32 %v678, 7
    %v680 = vsub.s32 %v677, %v679
    %v681 = vrot.slane %v673, %v680
    %v683 = vunpack.c.l.s4 1966171168
    %v684 = vunpack.c.0.s8 %v683
    %v685 = vlaneseq
    %v686 = vshrl.u32 %v685, 7
    %v687 = vsub.s32 %v684, %v686
    %v688 = vrot.slane %v674, %v687
    %v689 = vlaneseq
    %v690 = vshrl.u32 %v689, 7
    %v691 = vsub.s32 0, %v690
    %v692 = vrot.slane %v681, %v691
    %v693 = vlaneseq
    %v694 = vshrl.u32 %v693, 7
    %v695 = vsub.s32 0, %v694
    %v696 = vrot.slane %v688, %v695
    %vm697 = vcmp.lt.s32.totalorder %v664, %v692
    %vm698 = vcmp.lt.s32.totalorder %v665, %v692
    %vm699 = vcmp.lt.s32.totalorder %v664, %v696
    %vm700 = vcmp.lt.s32.totalorder %v665, %v696
    %v701 = vsel %vm697, %v659, 0.0
    %v702 = vsel %vm698, %v660, 0.0
    %v703 = vsel %vm699, %v661, 0.0
    %v704 = vsel %vm700, %v662, 0.0
    %706 = vset.pattern.permute.xlu0 0
    %707 = vperm.xlu0 %706, %v701
    %v708 = vpop.permute.xlu0 %707
    %711 = vset.pattern.permute.xlu0 0
    %712 = vperm.xlu0 %711, %v702
    %v713 = vpop.permute.xlu0 %712
    %716 = vset.pattern.permute.xlu0 0
    %717 = vperm.xlu0 %716, %v703
    %v718 = vpop.permute.xlu0 %717
    %721 = vset.pattern.permute.xlu0 0
    %722 = vperm.xlu0 %721, %v704
    %v723 = vpop.permute.xlu0 %722
    %v725 = vmul.f32 %v708, %v40
    %v726 = vmul.f32 %v713, %v41
    %v727 = vmul.f32 %v718, %v42
    %v728 = vmul.f32 %v723, %v43
    %v729 = vsel %vm84, %v725, 0.0
    %v730 = vsel %vm84, %v726, 0.0
    %v731 = vadd.f32 %v729, %v730
    %v732 = vrot.slane %v731, 4
    %v733 = vadd.f32 %v731, %v732
    %v734 = vrot.slane %v733, 2
    %v735 = vadd.f32 %v733, %v734
    %v736 = vrot.slane %v735, 1
    %v737 = vadd.f32 %v735, %v736
    %v738 = vsel %vm84, %v727, 0.0
    %v739 = vsel %vm84, %v728, 0.0
    %v740 = vadd.f32 %v738, %v739
    %v741 = vrot.slane %v740, 4
    %v742 = vadd.f32 %v740, %v741
    %v743 = vrot.slane %v742, 2
    %v744 = vadd.f32 %v742, %v743
    %v745 = vrot.slane %v744, 1
    %v746 = vadd.f32 %v744, %v745
    %vm749 = vcmask 1041409
    %v750 = vsel %vm749, %v746, %v737
    %vm752 = vcmask 58368
    %753 = vst.msk [vmem:[#allocation3] sm:$0x3] %vm752, %v750
    // Predicated region
    $region46: #{tpu_custom_call.1} parent=1 // pred_check
      _
    $region47: #{tpu_custom_call.1} parent=1 // pred_check_branch
      %755 = sbr.rel (0) target = $region49
    $region48: #{tpu_custom_call.1} parent=1 // pred_region
      %s757 = ssub.s32 32, 32
      %758 = vsyncadd [#allocation4], %s757
      %s760 = sshll.u32 [#allocation3], 4
      %s761 = int_to_ptr.vmem [resolvable:$true] %s760
      %763 = dma.vmem_to_hbm [thread:$0]  %s761, 32, %s11, [#allocation4]
    $region49: #{tpu_custom_call.1} parent=1 // pred_fallthru
      _
    // Predicated region
    $region50: #{tpu_custom_call.1} parent=1 // pred_check
      _
    $region51: #{tpu_custom_call.1} parent=1 // pred_check_branch
      %765 = sbr.rel (0) target = $region53
    $region52: #{tpu_custom_call.1} parent=1 // pred_region
      %766 = dma.done [#allocation4], 32
    $region53: #{tpu_custom_call.1} parent=1 // pred_fallthru
      _
    %767 = vsyncpa [#allocation4], 1

</llo_original>
